<compile_context>
chip_gen: v7x
topology: tpu7x:2x2x1
jax: 0.10.0
libtpu: 0.0.40
codegen_flags: <defaults>
</compile_context>

<pallas_src>
import math
import functools

import jax
import jax.numpy as jnp
from jax.experimental import pallas as pl
from jax.experimental.pallas import tpu as pltpu


_ON_TPU = jax.default_backend() == "tpu"


def _pos_encoding_table(dim_model: int, max_len: int) -> jnp.ndarray:
    """Replicates PositionalEncoding.__init__'s buffer -> (max_len, 1, dim_model)."""
    positions = jnp.arange(max_len, dtype=jnp.float32)[:, None]              # (max_len, 1)
    division_term = jnp.exp(
        jnp.arange(0, dim_model, 2, dtype=jnp.float32) * (-math.log(10000.0) / dim_model)
    )                                                                        # (dim_model//2,)
    pe = jnp.zeros((max_len, dim_model), dtype=jnp.float32)
    pe = pe.at[:, 0::2].set(jnp.sin(positions * division_term))
    pe = pe.at[:, 1::2].set(jnp.cos(positions * division_term))
    return pe[:, None, :]                                                    # (max_len, 1, dim_model)


# ----------------------------- kernels ------------------------------------ #

def _add_pe_kernel(x_ref, pe_ref, o_ref):
    # eval / p == 0 path: out = x + pe (pe broadcasts over batch in-register in
    # the 3-D layout; in the collapsed layout it is already (ts, B*D)).
    x = x_ref[...]
    o_ref[...] = x + pe_ref[...].astype(x.dtype)


def _add_pe_dropout_prng_kernel(seed_ref, x_ref, pe_ref, o_ref, *, threshold, scale):
    # TPU fast path: in-kernel hardware PRNG, per-tile seed => decorrelated masks,
    # no random-bit stream from HBM.
    pltpu.prng_seed(seed_ref[0], pl.program_id(0))
    x = x_ref[...]
    y = x + pe_ref[...].astype(x.dtype)
    bits = pltpu.bitcast(pltpu.prng_random_bits(y.shape), jnp.uint32)
    keep = bits >= jnp.uint32(threshold)               # keep prob ~= 1 - p (integer domain)
    o_ref[...] = y * jnp.where(keep,
                               jnp.asarray(scale, dtype=y.dtype),
                               jnp.asarray(0.0, dtype=y.dtype))


def _add_pe_dropout_bits_kernel(x_ref, pe_ref, bits_ref, o_ref, *, threshold, scale):
    # Portable path (interpret / non-TPU): random bits streamed as a regular input.
    x = x_ref[...]
    y = x + pe_ref[...].astype(x.dtype)
    keep = bits_ref[...] >= jnp.uint32(threshold)
    o_ref[...] = y * jnp.where(keep,
                               jnp.asarray(scale, dtype=y.dtype),
                               jnp.asarray(0.0, dtype=y.dtype))


# ----------------------------- tiling helpers ------------------------------ #

def _target_block_bytes() -> int:
    """Per-generation x-block target: VMEM use is ~4x the block (double-buffered
    x + out), so ~3 MiB on v5e (16 MiB scoped default) and ~6 MiB elsewhere."""
    try:
        kind = jax.devices()[0].device_kind.lower()
    except Exception:  # pragma: no cover - defensive
        kind = ""
    if "v5 lite" in kind or "v5e" in kind or "v5litepod" in kind:
        return 3 << 20
    return 6 << 20


def _choose_seq_tile(S: int, row_bytes: int, target_block_bytes: int,
                     *, min_steps: int = 4, min_block_bytes: int = 512 << 10) -> int:
    """Pick the sequence tile: as big as the target allows, but keep >= min_steps
    grid steps for mid/large inputs (v7x megacore) and balance tiles so there is
    no tiny ragged tail. The sublane dim stays 8-aligned."""
    rows = max(1, target_block_bytes // max(1, row_bytes))
    if S * row_bytes >= min_steps * min_block_bytes:
        rows = min(rows, pl.cdiv(S, min_steps))
    rows = min(rows, S)
    if rows < S:
        steps = pl.cdiv(S, rows)
        rows = pl.cdiv(S, steps)                      # balance tiles across steps
        rows = min(S, max(8, ((rows + 7) // 8) * 8))  # keep 8-aligned sublane dim
    return max(1, rows)


def _vmem_limit_bytes(x_block_bytes: int, pe_block_bytes: int) -> int:
    # Double-buffered x-in + out + pe-in, plus headroom. Cap well below v7x's
    # 64 MiB/TC physical VMEM; floor at the common 32 MiB scoped default.
    need = 2 * (2 * x_block_bytes + pe_block_bytes) + (2 << 20)
    return int(min(48 << 20, max(need, 32 << 20)))


# ----------------------------- wrapper ------------------------------------ #

def positional_encoding_forward(
    token_embedding: jnp.ndarray,   # (S, B, D)
    pos_encoding: jnp.ndarray,      # (max_len, 1, D) float32
    dropout_p: float,
    *,
    key=None,
    training: bool = True,
) -> jnp.ndarray:
    S, B, D = token_embedding.shape
    out_dtype = token_embedding.dtype
    p = float(dropout_p)

    if training and p >= 1.0:
        # Degenerate nn.Dropout(p=1) case: everything dropped.
        return jnp.zeros((S, B, D), out_dtype)

    pe_slice = pos_encoding[:S]                       # (S, 1, D) -- plain-JAX slice

    # Lane-dense layout decision (see module docstring).
    collapse = (D % 128 != 0)
    if collapse:
        x = token_embedding.reshape(S, B * D)                          # free contiguous reshape
        pe = jnp.tile(pe_slice[:, 0, :], (1, B)).astype(out_dtype)     # (S, B*D), tiny
        idx = lambda i: (i, 0)
        idx_p = lambda i, seed: (i, 0)
        x_tail, pe_tail = (B * D,), (B * D,)
    else:
        x = token_embedding
        pe = pe_slice.astype(out_dtype)                                # (S, 1, D)
        idx = lambda i: (i, 0, 0)
        idx_p = lambda i, seed: (i, 0, 0)
        x_tail, pe_tail = (B, D), (1, D)

    itemsize = jnp.dtype(out_dtype).itemsize
    row_bytes = B * D * itemsize
    pe_row_bytes = (pe.size // S) * jnp.dtype(pe.dtype).itemsize if S else 0

    ts = _choose_seq_tile(S, row_bytes, _target_block_bytes())
    grid = (pl.cdiv(S, ts),)

    x_block = (ts,) + x_tail
    pe_block = (ts,) + pe_tail
    x_spec = pl.BlockSpec(x_block, idx)
    pe_spec = pl.BlockSpec(pe_block, idx)
    out_spec = pl.BlockSpec(x_block, idx)
    out_shape = jax.ShapeDtypeStruct(x.shape, out_dtype)

    # Advisory cost: ~2 full streams (x read + out write) plus the pe stream.
    x_bytes = x.size * itemsize
    pe_bytes = pe.size * jnp.dtype(pe.dtype).itemsize
    cost = pl.CostEstimate(flops=3 * x.size, transcendentals=0,
                           bytes_accessed=2 * x_bytes + pe_bytes)

    compiler_params = None
    if _ON_TPU:
        compiler_params = pltpu.CompilerParams(
            dimension_semantics=("parallel",),
            vmem_limit_bytes=_vmem_limit_bytes(ts * row_bytes, ts * pe_row_bytes),
        )

    apply_dropout = training and p > 0.0
    if not apply_dropout:
        out = pl.pallas_call(
            _add_pe_kernel,
            out_shape=out_shape,
            grid=grid,
            in_specs=[x_spec, pe_spec],
            out_specs=out_spec,
            compiler_params=compiler_params,
            cost_estimate=cost,
        )(x, pe)
        return out.reshape(S, B, D) if collapse else out

    # Integer-domain dropout threshold: drop iff bits < round(p * 2^32).
    threshold = min(int(round(p * float(2 ** 32))), 2 ** 32 - 1)
    scale = 1.0 / (1.0 - p)
    if key is None:
        key = jax.random.PRNGKey(0)

    if _ON_TPU:
        # In-kernel hardware PRNG: seed lands in SMEM via scalar prefetch.
        seed = jax.random.randint(key, (1,), minval=0, maxval=2 ** 31 - 1, dtype=jnp.int32)
        kernel = functools.partial(_add_pe_dropout_prng_kernel,
                                   threshold=threshold, scale=scale)
        out = pl.pallas_call(
            kernel,
            out_shape=out_shape,
            grid_spec=pltpu.PrefetchScalarGridSpec(
                num_scalar_prefetch=1,
                grid=grid,
                in_specs=[
                    pl.BlockSpec(x_block, idx_p),
                    pl.BlockSpec(pe_block, idx_p),
                ],
                out_specs=pl.BlockSpec(x_block, idx_p),
            ),
            compiler_params=compiler_params,
            cost_estimate=cost,
        )(seed, x, pe)
        return out.reshape(S, B, D) if collapse else out

    # Off-TPU fallback: stream precomputed uint32 bits through the same pipeline.
    bits = jax.random.bits(key, x.shape, dtype=jnp.uint32)
    kernel = functools.partial(_add_pe_dropout_bits_kernel,
                               threshold=threshold, scale=scale)
    out = pl.pallas_call(
        kernel,
        out_shape=out_shape,
        grid=grid,
        in_specs=[x_spec, pe_spec, pl.BlockSpec(x_block, idx)],
        out_specs=out_spec,
        compiler_params=compiler_params,
        cost_estimate=cost,
    )(x, pe, bits)
    return out.reshape(S, B, D) if collapse else out


# ------------------------------- demo -------------------------------------- #

if __name__ == "__main__":
    # Module hyperparameters (small, consistent with the forward semantics).
    dim_model = 32
    dropout_p = 0.1
    max_len = 64

    # Deterministic example input: (seq_len, batch, dim_model).
    seq_len, batch = 8, 2
    key = jax.random.PRNGKey(0)
    k_x, k_drop, k_x2, k_drop2 = jax.random.split(key, 4)
    token_embedding = jax.random.normal(k_x, (seq_len, batch, dim_model), dtype=jnp.float32)
    pos_encoding = _pos_encoding_table(dim_model, max_len)

    # Train mode (dropout active) -- exercises the collapsed lane-dense path (D=32).
    out = positional_encoding_forward(
        token_embedding, pos_encoding, dropout_p, key=k_drop, training=True
    )
    out = jax.block_until_ready(out)
    assert out.shape == (seq_len, batch, dim_model)
    assert out.dtype == jnp.float32

    # Eval mode (no dropout) must exactly match x + pe.
    out_eval = positional_encoding_forward(
        token_embedding, pos_encoding, dropout_p, key=k_drop, training=False
    )
    out_eval = jax.block_until_ready(out_eval)
    ref_eval = token_embedding + pos_encoding[:seq_len]
    assert jnp.allclose(out_eval, ref_eval, atol=1e-6)

    # Train-mode structural check: every element is either 0 or (x+pe)/(1-p).
    scaled_ref = ref_eval / (1.0 - dropout_p)
    ok = jnp.isclose(out, scaled_ref, atol=1e-5) | jnp.isclose(out, 0.0, atol=1e-7)
    assert bool(jnp.all(ok))

    # Also exercise the non-collapsed 3-D path (D % 128 == 0, pe streamed as (ts,1,D)).
    dim2 = 128
    pos_encoding2 = _pos_encoding_table(dim2, max_len)
    x2 = jax.random.normal(k_x2, (16, 4, dim2), dtype=jnp.float32)

    out2_eval = positional_encoding_forward(
        x2, pos_encoding2, dropout_p, key=k_drop2, training=False
    )
    out2_eval = jax.block_until_ready(out2_eval)
    ref2_eval = x2 + pos_encoding2[:16]
    assert jnp.allclose(out2_eval, ref2_eval, atol=1e-6)

    out2 = positional_encoding_forward(
        x2, pos_encoding2, dropout_p, key=k_drop2, training=True
    )
    out2 = jax.block_until_ready(out2)
    scaled_ref2 = ref2_eval / (1.0 - dropout_p)
    ok2 = jnp.isclose(out2, scaled_ref2, atol=1e-5) | jnp.isclose(out2, 0.0, atol=1e-7)
    assert bool(jnp.all(ok2))

    print("KERNEL_OK")
</pallas_src>

<mosaic_0001>
module attributes {stable_mosaic.version = 11 : i64} {
  func.func @_add_pe_dropout_bits_kernel(%arg0: i32, %arg1: memref<8x64xf32, #tpu.memory_space<vmem>>, %arg2: memref<8x64xf32, #tpu.memory_space<vmem>>, %arg3: memref<8x64xi32, #tpu.memory_space<vmem>>, %arg4: memref<8x64xf32, #tpu.memory_space<vmem>>) attributes {dimension_semantics = [#tpu.dimension_semantics<arbitrary>], iteration_bounds = array<i64: 1>, scalar_prefetch = 0 : i64, scratch_operands = 0 : i64, tpu.core_type = #tpu.core_type<tc>, window_params = [{transform_indices = @transform_0, window_bounds = array<i64: 8, 64>}, {transform_indices = @transform_1, window_bounds = array<i64: 8, 64>}, {transform_indices = @transform_2, window_bounds = array<i64: 8, 64>}, {transform_indices = @transform_3, window_bounds = array<i64: 8, 64>}]} {
    %c0 = arith.constant 0 : index
    %c0_0 = arith.constant 0 : index
    %0 = vector.load %arg1[%c0, %c0_0] : memref<8x64xf32, #tpu.memory_space<vmem>>, vector<8x64xf32>
    %c0_1 = arith.constant 0 : index
    %c0_2 = arith.constant 0 : index
    %1 = vector.load %arg2[%c0_1, %c0_2] : memref<8x64xf32, #tpu.memory_space<vmem>>, vector<8x64xf32>
    %2 = arith.addf %0, %1 : vector<8x64xf32>
    %c0_3 = arith.constant 0 : index
    %c0_4 = arith.constant 0 : index
    %3 = vector.load %arg3[%c0_3, %c0_4] : memref<8x64xi32, #tpu.memory_space<vmem>>, vector<8x64xi32>
    %c429496730_i32 = arith.constant 429496730 : i32
    %4 = vector.broadcast %c429496730_i32 : i32 to vector<8x64xi32>
    %5 = arith.cmpi uge, %3, %4 : vector<8x64xi32>
    %cst = arith.constant 1.11111116 : f32
    %cst_5 = arith.constant 0.000000e+00 : f32
    %6 = vector.broadcast %cst : f32 to vector<8x64xf32>
    %7 = vector.broadcast %cst_5 : f32 to vector<8x64xf32>
    %8 = arith.select %5, %6, %7 : vector<8x64xi1>, vector<8x64xf32>
    %9 = arith.mulf %2, %8 : vector<8x64xf32>
    %c0_6 = arith.constant 0 : index
    %c0_7 = arith.constant 0 : index
    %10 = vector.load %arg4[%c0_6, %c0_7] : memref<8x64xf32, #tpu.memory_space<vmem>>, vector<8x64xf32>
    tpu.vector_store %arg4[%c0_6, %c0_7], %9 {strides = array<i32>} : memref<8x64xf32, #tpu.memory_space<vmem>>, vector<8x64xf32>,
    return
  }
  func.func @transform_0(%arg0: i32) -> (i32, i32) {
    %c0_i32 = arith.constant 0 : i32
    %c0_i32_0 = arith.constant 0 : i32
    return %arg0, %c0_i32 : i32, i32
  }
  func.func @transform_1(%arg0: i32) -> (i32, i32) {
    %c0_i32 = arith.constant 0 : i32
    %c0_i32_0 = arith.constant 0 : i32
    return %arg0, %c0_i32 : i32, i32
  }
  func.func @transform_2(%arg0: i32) -> (i32, i32) {
    %c0_i32 = arith.constant 0 : i32
    %c0_i32_0 = arith.constant 0 : i32
    return %arg0, %c0_i32 : i32, i32
  }
  func.func @transform_3(%arg0: i32) -> (i32, i32) {
    %c0_i32 = arith.constant 0 : i32
    %c0_i32_0 = arith.constant 0 : i32
    return %arg0, %c0_i32 : i32, i32
  }
}

</mosaic_0001>

<llo_original>
// kernel: tpu_custom_call.1
$region0: #{tpu_custom_call.1}
  #allocation0 [shape = 'u32[]', space=smem, size = 0x4, offset = 0x4, fixed_abs, tag = 'smem constant byte address 0x4 - core index']
  #allocation1 [shape = 'u32[144,128]{1,0:T(1,128)}', space=vmem, size = 0x12000, scoped, tag = 'internal scratch']
  %s0 = inlined_call_operand.hbm [shape: f32[8,64], index: 0, kind: input, shape index: {}]
  %s1 = inlined_call_operand.hbm [shape: f32[8,64], index: 1, kind: input, shape index: {}]
  %s2 = inlined_call_operand.hbm [shape: u32[8,64], index: 2, kind: input, shape index: {}]
  %s3 = inlined_call_operand.hbm [shape: f32[8,64], index: 3, kind: output, shape index: {}]
  %s4 = sld [smem:[#allocation0]]
  $region34: #{tpu_custom_call.1} parent=0
    _
  %s6 = ssub.s32 1, %s4
  %s7 = scalar_select 0, %s6, %s4
  $region1: #{tpu_custom_call.1} parent=0
    #allocation2 [shape = 'u8[4096]{0}', space=vmem, size = 0x1000, scoped, tag = 'input window, operand 0, single buffered']
    #allocation3 [shape = 's32[1]{0}', space=sflag, size = 0x4, scoped, tag = 'scoped memory for tpu_custom_call.1']
    #allocation4 [shape = 's32[1]{0}', space=sflag, size = 0x4, scoped, tag = 'scoped memory for tpu_custom_call.1']
    #allocation5 [shape = 'u8[4096]{0}', space=vmem, size = 0x1000, scoped, tag = 'input window, operand 1, single buffered']
    #allocation6 [shape = 's32[1]{0}', space=sflag, size = 0x4, scoped, tag = 'scoped memory for tpu_custom_call.1']
    #allocation7 [shape = 'u8[4096]{0}', space=vmem, size = 0x1000, scoped, tag = 'input window, operand 2, single buffered']
    #allocation8 [shape = 'u8[4096]{0}', space=vmem, size = 0x1000, scoped, tag = 'output window, operand 0, single buffered']
    %8 = vsyncpa [#allocation3], 0
    %9 = vsyncpa [#allocation6], 0
    %10 = vsyncpa [#allocation4], 0
    // Predicated region
    $region2: #{tpu_custom_call.1} parent=1 // pred_check
      _
    $region3: #{tpu_custom_call.1} parent=1 // pred_check_branch
      %12 = sbr.rel (0) target = $region5
    $region4: #{tpu_custom_call.1} parent=1 // pred_region
      %s14 = ssub.s32 128, 128
      %15 = vsyncadd [#allocation3], %s14
      %s17 = sshll.u32 [#allocation2], 4
      %s18 = int_to_ptr.vmem [resolvable:$true] %s17
      %20 = dma.hbm_to_vmem [thread:$0]  %s0, 128, %s18, [#allocation3]
    $region5: #{tpu_custom_call.1} parent=1 // pred_fallthru
      _
    // Predicated region
    $region6: #{tpu_custom_call.1} parent=1 // pred_check
      _
    $region7: #{tpu_custom_call.1} parent=1 // pred_check_branch
      %22 = sbr.rel (0) target = $region9
    $region8: #{tpu_custom_call.1} parent=1 // pred_region
      %s24 = ssub.s32 128, 128
      %25 = vsyncadd [#allocation6], %s24
      %s27 = sshll.u32 [#allocation5], 4
      %s28 = int_to_ptr.vmem [resolvable:$true] %s27
      %30 = dma.hbm_to_vmem [thread:$0]  %s1, 128, %s28, [#allocation6]
    $region9: #{tpu_custom_call.1} parent=1 // pred_fallthru
      _
    // Predicated region
    $region10: #{tpu_custom_call.1} parent=1 // pred_check
      _
    $region11: #{tpu_custom_call.1} parent=1 // pred_check_branch
      %32 = sbr.rel (0) target = $region13
    $region12: #{tpu_custom_call.1} parent=1 // pred_region
      %s34 = ssub.s32 128, 128
      %35 = vsyncadd [#allocation6], %s34
      %s37 = sshll.u32 [#allocation7], 4
      %s38 = int_to_ptr.vmem [resolvable:$true] %s37
      %40 = dma.hbm_to_vmem [thread:$0]  %s2, 128, %s38, [#allocation6]
    $region13: #{tpu_custom_call.1} parent=1 // pred_fallthru
      _
    // Predicated region
    $region14: #{tpu_custom_call.1} parent=1 // pred_check
      _
    $region15: #{tpu_custom_call.1} parent=1 // pred_check_branch
      %42 = sbr.rel (0) target = $region17
    $region16: #{tpu_custom_call.1} parent=1 // pred_region
      %43 = dma.done [#allocation3], 128
    $region17: #{tpu_custom_call.1} parent=1 // pred_fallthru
      _
    // Predicated region
    $region18: #{tpu_custom_call.1} parent=1 // pred_check
      _
    $region19: #{tpu_custom_call.1} parent=1 // pred_check_branch
      %45 = sbr.rel (0) target = $region21
    $region20: #{tpu_custom_call.1} parent=1 // pred_region
      %46 = dma.done [#allocation6], 128
    $region21: #{tpu_custom_call.1} parent=1 // pred_fallthru
      _
    // Predicated region
    $region22: #{tpu_custom_call.1} parent=1 // pred_check
      _
    $region23: #{tpu_custom_call.1} parent=1 // pred_check_branch
      %48 = sbr.rel (0) target = $region25
    $region24: #{tpu_custom_call.1} parent=1 // pred_region
      %49 = dma.done [#allocation6], 128
    $region25: #{tpu_custom_call.1} parent=1 // pred_fallthru
      _
    %v50 = vld [vmem:[#allocation2] sm:$0xff]
    %v51 = vld [vmem:[#allocation5] sm:$0xff]
    %v52 = vadd.f32 %v50, %v51
    %v53 = vld [vmem:[#allocation7] sm:$0xff]
    %vm54 = vcmp.ge.u32.totalorder %v53, 429496730
    %v55 = vsel %vm54, 1.1111112, 0.0
    %v56 = vmul.f32 %v52, %v55
    %vm57 = vcmask 523264
    %58 = vst.msk [vmem:[#allocation8] sm:$0xff] %vm57, %v56
    // Predicated region
    $region26: #{tpu_custom_call.1} parent=1 // pred_check
      _
    $region27: #{tpu_custom_call.1} parent=1 // pred_check_branch
      %60 = sbr.rel (0) target = $region29
    $region28: #{tpu_custom_call.1} parent=1 // pred_region
      %s62 = ssub.s32 128, 128
      %63 = vsyncadd [#allocation4], %s62
      %s65 = sshll.u32 [#allocation8], 4
      %s66 = int_to_ptr.vmem [resolvable:$true] %s65
      %68 = dma.vmem_to_hbm [thread:$0]  %s66, 128, %s3, [#allocation4]
    $region29: #{tpu_custom_call.1} parent=1 // pred_fallthru
      _
    // Predicated region
    $region30: #{tpu_custom_call.1} parent=1 // pred_check
      _
    $region31: #{tpu_custom_call.1} parent=1 // pred_check_branch
      %70 = sbr.rel (0) target = $region33
    $region32: #{tpu_custom_call.1} parent=1 // pred_region
      %71 = dma.done [#allocation4], 128
    $region33: #{tpu_custom_call.1} parent=1 // pred_fallthru
      _
    %72 = vsyncpa [#allocation3], 1
    %73 = vsyncpa [#allocation6], 1
    %74 = vsyncpa [#allocation4], 1

</llo_original>
